<compile_context>
chip_gen: v5e
topology: v5e:2x2
jax: 0.10.0
libtpu: 0.0.40
codegen_flags: <defaults>
</compile_context>

<pallas_src>
import math

import jax
import jax.numpy as jnp
from jax.experimental import pallas as pl
from jax.experimental.pallas import tpu as pltpu

_LANE = 128
_SUBLANE = 8


def _pad_to(n: int, m: int) -> int:
    return ((n + m - 1) // m) * m


def prepare_params(params, compute_dtype=jnp.bfloat16):
    """One-time prep: pad hidden lane dims to 128, cast weights to bf16, pack biases.

    Call once and reuse the result across forward calls (weights stay cached on device).
    """
    w1, b1, w2, b2, w3, b3 = (params[k] for k in ("w1", "b1", "w2", "b2", "w3", "b3"))
    I, H1 = w1.shape
    H2 = w2.shape[1]
    O = w3.shape[1]
    H1p = _pad_to(H1, _LANE)
    H2p = _pad_to(H2, _LANE)
    # Note (v6e/v7x): if hidden sizes grow past 128, padding H1p/H2p to multiples of 256
    # better fills the 2x256x256 MXU. Irrelevant at today's sizes (latency-bound).

    # Only lane dims of the hidden activations are padded; w1 rows (I) and w3 cols (O)
    # keep their real sizes. Padded rows of w2/w3 are zero (no leakage through ReLU).
    w1p = jnp.zeros((I, H1p), compute_dtype).at[:, :H1].set(w1.astype(compute_dtype))
    w2p = jnp.zeros((H1p, H2p), compute_dtype).at[:H1, :H2].set(w2.astype(compute_dtype))
    w3p = jnp.zeros((H2p, O), compute_dtype).at[:H2, :].set(w3.astype(compute_dtype))

    # Pack the three biases (f32) into one operand; padded bias lanes are zero.
    bp = jnp.zeros((1, H1p + H2p + O), jnp.float32)
    bp = bp.at[:, :H1].set(b1.reshape(1, H1))
    bp = bp.at[:, H1p:H1p + H2].set(b2.reshape(1, H2))
    bp = bp.at[:, H1p + H2p:].set(b3.reshape(1, O))

    return {
        "w1p": w1p, "w2p": w2p, "w3p": w3p, "bp": bp,
        "dims": (I, H1p, H2p, O),
    }


def linear_qnet_forward(x, prepared, *, tile_b: int = 256):
    """x: (B, input_size) float32. prepared: output of prepare_params()."""
    w1p, w2p, w3p, bp = prepared["w1p"], prepared["w2p"], prepared["w3p"], prepared["bp"]
    I, H1p, H2p, O = prepared["dims"]
    assert x.shape[1] == I
    B = x.shape[0]

    # Batch tiling: multiple of 8 (f32 sublane); shrink to the (padded) batch if small.
    tile_b = max(_SUBLANE, _pad_to(int(tile_b), _SUBLANE))
    Bp = _pad_to(B, _SUBLANE)
    if Bp <= tile_b:
        tile_b = Bp
    else:
        Bp = _pad_to(B, tile_b)
    # v7x note: with >= 2 grid steps the "parallel" axis shards across both TensorCores;
    # for very large batches keep the step count even.

    xp = x if Bp == B else jnp.pad(x, ((0, Bp - B), (0, 0)))

    def kernel(x_ref, w1_ref, w2_ref, w3_ref, b_ref, o_ref):
        # Cast to bf16 in-kernel (VPU cast is free-ish; avoids a wrapper launch).
        xv = x_ref[...].astype(w1_ref.dtype)                       # (tile_b, I)
        # fc1 + ReLU (MXU bf16, f32 accumulate; elementwise in f32)
        h1 = jnp.dot(xv, w1_ref[...], preferred_element_type=jnp.float32)
        h1 = jnp.maximum(h1 + b_ref[:, :H1p], 0.0)
        # fc2 + ReLU
        h2 = jnp.dot(h1.astype(w2_ref.dtype), w2_ref[...],
                     preferred_element_type=jnp.float32)
        h2 = jnp.maximum(h2 + b_ref[:, H1p:H1p + H2p], 0.0)
        # fc3 (real output width O, stored directly)
        out = jnp.dot(h2.astype(w3_ref.dtype), w3_ref[...],
                      preferred_element_type=jnp.float32)
        o_ref[...] = (out + b_ref[:, H1p + H2p:]).astype(o_ref.dtype)

    flops = 2 * Bp * (I * H1p + H1p * H2p + H2p * O)
    bytes_accessed = (Bp * I * 4                                   # x (f32)
                      + (I * H1p + H1p * H2p + H2p * O) * 2        # bf16 weights
                      + (H1p + H2p + O) * 4                        # packed bias
                      + Bp * O * 4)                                # output

    out_full = pl.pallas_call(
        kernel,
        out_shape=jax.ShapeDtypeStruct((Bp, O), jnp.float32),
        grid_spec=pltpu.PrefetchScalarGridSpec(
            num_scalar_prefetch=0,
            grid=(Bp // tile_b,),
            in_specs=[
                pl.BlockSpec((tile_b, I), lambda i: (i, 0)),           # x: tiled over batch
                pl.BlockSpec((I, H1p), lambda i: (0, 0)),              # weights: VMEM-resident
                pl.BlockSpec((H1p, H2p), lambda i: (0, 0)),
                pl.BlockSpec((H2p, O), lambda i: (0, 0)),
                pl.BlockSpec((1, H1p + H2p + O), lambda i: (0, 0)),    # packed biases
            ],
            out_specs=pl.BlockSpec((tile_b, O), lambda i: (i, 0)),
        ),
        compiler_params=pltpu.CompilerParams(
            dimension_semantics=("parallel",),
        ),
        cost_estimate=pl.CostEstimate(
            flops=flops, bytes_accessed=bytes_accessed, transcendentals=0),
    )(xp, w1p, w2p, w3p, bp)

    return out_full if Bp == B else out_full[:B]


def init_linear_qnet_params(key, input_size, hidden1_size, hidden2_size, output_size):
    """Matches the PyTorch module's _init_weights:
       fc1/fc2: kaiming_uniform_(nonlinearity='relu'), bias=0
       fc3:     xavier_uniform_, bias=0
       Weights stored transposed relative to PyTorch: (in, out)."""
    k1, k2, k3 = jax.random.split(key, 3)

    def kaiming_uniform(k, fan_in, fan_out):
        # PyTorch: bound = gain * sqrt(3 / fan_in), gain(relu)=sqrt(2) -> sqrt(6 / fan_in)
        bound = math.sqrt(6.0 / fan_in)
        return jax.random.uniform(k, (fan_in, fan_out), jnp.float32, -bound, bound)

    def xavier_uniform(k, fan_in, fan_out):
        bound = math.sqrt(6.0 / (fan_in + fan_out))
        return jax.random.uniform(k, (fan_in, fan_out), jnp.float32, -bound, bound)

    return {
        "w1": kaiming_uniform(k1, input_size, hidden1_size),
        "b1": jnp.zeros((1, hidden1_size), jnp.float32),
        "w2": kaiming_uniform(k2, hidden1_size, hidden2_size),
        "b2": jnp.zeros((1, hidden2_size), jnp.float32),
        "w3": xavier_uniform(k3, hidden2_size, output_size),
        "b3": jnp.zeros((1, output_size), jnp.float32),
    }
    # TODO(synk): PyTorch .save() (torch.save of state_dict) has no Pallas equivalent; omitted.


def _reference_f32(x, params):
    h1 = jnp.maximum(x @ params["w1"] + params["b1"], 0.0)
    h2 = jnp.maximum(h1 @ params["w2"] + params["b2"], 0.0)
    return h2 @ params["w3"] + params["b3"]


def _reference_bf16(x, params):
    bf = jnp.bfloat16
    h1 = jnp.maximum(
        jnp.dot(x.astype(bf), params["w1"].astype(bf), preferred_element_type=jnp.float32)
        + params["b1"], 0.0)
    h2 = jnp.maximum(
        jnp.dot(h1.astype(bf), params["w2"].astype(bf), preferred_element_type=jnp.float32)
        + params["b2"], 0.0)
    return (jnp.dot(h2.astype(bf), params["w3"].astype(bf), preferred_element_type=jnp.float32)
            + params["b3"])


if __name__ == "__main__":
    # Small shapes consistent with Linear_QNet(input_size, h1, h2, output_size).
    batch, input_size, hidden1, hidden2, output_size = 8, 32, 64, 32, 8

    key = jax.random.PRNGKey(0)
    pkey, xkey, xkey2 = jax.random.split(key, 3)
    params = init_linear_qnet_params(pkey, input_size, hidden1, hidden2, output_size)
    prepared = prepare_params(params)  # one-time: pad/cast weights, pack biases

    # Case 1: small batch (single grid step).
    x = jax.random.normal(xkey, (batch, input_size), jnp.float32)
    out = jax.block_until_ready(linear_qnet_forward(x, prepared))
    assert out.shape == (batch, output_size)
    assert jnp.allclose(out, _reference_bf16(x, params), atol=1e-2, rtol=1e-2)
    assert jnp.allclose(out, _reference_f32(x, params), atol=5e-2, rtol=5e-2)

    # Case 2: batch not a multiple of the tile (exercises multi-step grid + batch pad).
    x2 = jax.random.normal(xkey2, (40, input_size), jnp.float32)
    out2 = jax.block_until_ready(linear_qnet_forward(x2, prepared, tile_b=16))
    assert out2.shape == (40, output_size)
    assert jnp.allclose(out2, _reference_bf16(x2, params), atol=1e-2, rtol=1e-2)
    assert jnp.allclose(out2, _reference_f32(x2, params), atol=5e-2, rtol=5e-2)

    print("KERNEL_OK")
</pallas_src>

<mosaic_0001>
module attributes {stable_mosaic.version = 11 : i64} {
  func.func @kernel(%arg0: i32, %arg1: memref<8x32xf32, #tpu.memory_space<vmem>>, %arg2: memref<32x128xbf16, #tpu.memory_space<vmem>>, %arg3: memref<128x128xbf16, #tpu.memory_space<vmem>>, %arg4: memref<128x8xbf16, #tpu.memory_space<vmem>>, %arg5: memref<1x264xf32, #tpu.memory_space<vmem>>, %arg6: memref<8x8xf32, #tpu.memory_space<vmem>>) attributes {dimension_semantics = [#tpu.dimension_semantics<parallel>], iteration_bounds = array<i64: 1>, scalar_prefetch = 0 : i64, scratch_operands = 0 : i64, tpu.core_type = #tpu.core_type<tc>, window_params = [{transform_indices = @transform_0, window_bounds = array<i64: 8, 32>}, {pipeline_mode = #tpu.pipeline_mode<synchronous>, transform_indices = @transform_1, window_bounds = array<i64: 32, 128>}, {pipeline_mode = #tpu.pipeline_mode<synchronous>, transform_indices = @transform_2, window_bounds = array<i64: 128, 128>}, {pipeline_mode = #tpu.pipeline_mode<synchronous>, transform_indices = @transform_3, window_bounds = array<i64: 128, 8>}, {pipeline_mode = #tpu.pipeline_mode<synchronous>, transform_indices = @transform_4, window_bounds = array<i64: 1, 264>}, {transform_indices = @transform_5, window_bounds = array<i64: 8, 8>}]} {
    %c0 = arith.constant 0 : index
    %c0_0 = arith.constant 0 : index
    %0 = vector.load %arg1[%c0, %c0_0] : memref<8x32xf32, #tpu.memory_space<vmem>>, vector<8x32xf32>
    %1 = arith.truncf %0 : vector<8x32xf32> to vector<8x32xbf16>
    %c0_1 = arith.constant 0 : index
    %c0_2 = arith.constant 0 : index
    %2 = vector.load %arg2[%c0_1, %c0_2] : memref<32x128xbf16, #tpu.memory_space<vmem>>, vector<32x128xbf16>
    %cst = arith.constant dense<0.000000e+00> : vector<8x128xf32>
    %3 = tpu.matmul %1, %2, %cst {dimension_numbers = #tpu.dot_dimension_numbers<[1], [0], [0], [1], [0, 0, 1, 1], [], []>} : vector<8x32xbf16>, vector<32x128xbf16>, vector<8x128xf32> -> vector<8x128xf32>
    %c0_3 = arith.constant 0 : index
    %c0_4 = arith.constant 0 : index
    %4 = vector.load %arg5[%c0_3, %c0_4] : memref<1x264xf32, #tpu.memory_space<vmem>>, vector<1x128xf32>
    %5 = vector.broadcast %4 : vector<1x128xf32> to vector<8x128xf32>
    %6 = arith.addf %3, %5 : vector<8x128xf32>
    %cst_5 = arith.constant 0.000000e+00 : f32
    %7 = vector.broadcast %cst_5 : f32 to vector<8x128xf32>
    %8 = arith.maximumf %6, %7 : vector<8x128xf32>
    %9 = arith.truncf %8 : vector<8x128xf32> to vector<8x128xbf16>
    %c0_6 = arith.constant 0 : index
    %c0_7 = arith.constant 0 : index
    %10 = vector.load %arg3[%c0_6, %c0_7] : memref<128x128xbf16, #tpu.memory_space<vmem>>, vector<128x128xbf16>
    %cst_8 = arith.constant dense<0.000000e+00> : vector<8x128xf32>
    %11 = tpu.matmul %9, %10, %cst_8 {dimension_numbers = #tpu.dot_dimension_numbers<[1], [0], [0], [1], [0, 0, 1, 1], [], []>} : vector<8x128xbf16>, vector<128x128xbf16>, vector<8x128xf32> -> vector<8x128xf32>
    %c0_9 = arith.constant 0 : index
    %c128 = arith.constant 128 : index
    %12 = vector.load %arg5[%c0_9, %c128] : memref<1x264xf32, #tpu.memory_space<vmem>>, vector<1x128xf32>
    %13 = vector.broadcast %12 : vector<1x128xf32> to vector<8x128xf32>
    %14 = arith.addf %11, %13 : vector<8x128xf32>
    %cst_10 = arith.constant 0.000000e+00 : f32
    %15 = vector.broadcast %cst_10 : f32 to vector<8x128xf32>
    %16 = arith.maximumf %14, %15 : vector<8x128xf32>
    %17 = arith.truncf %16 : vector<8x128xf32> to vector<8x128xbf16>
    %c0_11 = arith.constant 0 : index
    %c0_12 = arith.constant 0 : index
    %18 = vector.load %arg4[%c0_11, %c0_12] : memref<128x8xbf16, #tpu.memory_space<vmem>>, vector<128x8xbf16>
    %cst_13 = arith.constant dense<0.000000e+00> : vector<8x8xf32>
    %19 = tpu.matmul %17, %18, %cst_13 {dimension_numbers = #tpu.dot_dimension_numbers<[1], [0], [0], [1], [0, 0, 1, 1], [], []>} : vector<8x128xbf16>, vector<128x8xbf16>, vector<8x8xf32> -> vector<8x8xf32>
    %c0_14 = arith.constant 0 : index
    %c256 = arith.constant 256 : index
    %20 = vector.load %arg5[%c0_14, %c256] : memref<1x264xf32, #tpu.memory_space<vmem>>, vector<1x8xf32>
    %21 = vector.broadcast %20 : vector<1x8xf32> to vector<8x8xf32>
    %22 = arith.addf %19, %21 : vector<8x8xf32>
    %c0_15 = arith.constant 0 : index
    %c0_16 = arith.constant 0 : index
    %23 = vector.load %arg6[%c0_15, %c0_16] : memref<8x8xf32, #tpu.memory_space<vmem>>, vector<8x8xf32>
    tpu.vector_store %arg6[%c0_15, %c0_16], %22 {strides = array<i32>} : memref<8x8xf32, #tpu.memory_space<vmem>>, vector<8x8xf32>,
    return
  }
  func.func @transform_0(%arg0: i32) -> (i32, i32) {
    %c0_i32 = arith.constant 0 : i32
    %c0_i32_0 = arith.constant 0 : i32
    return %arg0, %c0_i32 : i32, i32
  }
  func.func @transform_1(%arg0: i32) -> (i32, i32) {
    %c0_i32 = arith.constant 0 : i32
    %c0_i32_0 = arith.constant 0 : i32
    %c0_i32_1 = arith.constant 0 : i32
    return %c0_i32, %c0_i32_0 : i32, i32
  }
  func.func @transform_2(%arg0: i32) -> (i32, i32) {
    %c0_i32 = arith.constant 0 : i32
    %c0_i32_0 = arith.constant 0 : i32
    %c0_i32_1 = arith.constant 0 : i32
    return %c0_i32, %c0_i32_0 : i32, i32
  }
  func.func @transform_3(%arg0: i32) -> (i32, i32) {
    %c0_i32 = arith.constant 0 : i32
    %c0_i32_0 = arith.constant 0 : i32
    %c0_i32_1 = arith.constant 0 : i32
    return %c0_i32, %c0_i32_0 : i32, i32
  }
  func.func @transform_4(%arg0: i32) -> (i32, i32) {
    %c0_i32 = arith.constant 0 : i32
    %c0_i32_0 = arith.constant 0 : i32
    %c0_i32_1 = arith.constant 0 : i32
    return %c0_i32, %c0_i32_0 : i32, i32
  }
  func.func @transform_5(%arg0: i32) -> (i32, i32) {
    %c0_i32 = arith.constant 0 : i32
    %c0_i32_0 = arith.constant 0 : i32
    return %arg0, %c0_i32 : i32, i32
  }
}

</mosaic_0001>

<llo_original>
// kernel: tpu_custom_call.1
$region0: #{tpu_custom_call.1}
  #allocation0 [shape = 'u32[]', space=smem, size = 0x4, offset = 0x4, fixed_abs, tag = 'smem constant byte address 0x4 - core index']
  #allocation1 [shape = 'u32[72,128]{1,0:T(1,128)}', space=vmem, size = 0x9000, scoped, tag = 'internal scratch']
  %s0 = inlined_call_operand.hbm [shape: f32[8,32], index: 0, kind: input, shape index: {}]
  %s1 = inlined_call_operand.hbm [shape: bf16[32,128], index: 1, kind: input, shape index: {}]
  %s2 = inlined_call_operand.vmem [shape: bf16[128,128], index: 2, kind: input, shape index: {}]
  %s3 = inlined_call_operand.vmem [shape: bf16[128,8], index: 3, kind: input, shape index: {}]
  %s4 = inlined_call_operand.vmem [shape: f32[1,264], index: 4, kind: input, shape index: {}]
  %s5 = inlined_call_operand.hbm [shape: f32[8,8], index: 5, kind: output, shape index: {}]
  %s6 = sld [smem:[#allocation0]]
  $region38: #{tpu_custom_call.1} parent=0
    _
  %s8 = ssub.s32 1, %s6
  %s9 = scalar_select 0, %s8, %s6
  $region1: #{tpu_custom_call.1} parent=0
    #allocation2 [shape = 'u8[4096]{0}', space=vmem, size = 0x1000, scoped, tag = 'input window, operand 0, single buffered']
    #allocation3 [shape = 's32[1]{0}', space=sflag, size = 0x4, scoped, tag = 'scoped memory for tpu_custom_call.1']
    #allocation4 [shape = 's32[1]{0}', space=sflag, size = 0x4, scoped, tag = 'scoped memory for tpu_custom_call.1']
    #allocation5 [shape = 'u8[8192]{0}', space=vmem, size = 0x2000, scoped, tag = 'input window, operand 1, single buffered']
    #allocation6 [shape = 's32[1]{0}', space=sflag, size = 0x4, scoped, tag = 'scoped memory for tpu_custom_call.1']
    #allocation7 [shape = 'u8[4096]{0}', space=vmem, size = 0x1000, scoped, tag = 'output window, operand 0, single buffered']
    %10 = vsyncpa [#allocation3], 0
    %11 = vsyncpa [#allocation6], 0
    %12 = vsyncpa [#allocation4], 0
    // Predicated region
    $region2: #{tpu_custom_call.1} parent=1 // pred_check
      _
    $region3: #{tpu_custom_call.1} parent=1 // pred_check_branch
      %14 = sbr.rel (0) target = $region5
    $region4: #{tpu_custom_call.1} parent=1 // pred_region
      %16 = vsyncadd [#allocation3], 0
      %s18 = sshll.u32 %s0, 4
      %s19 = int_to_ptr.hbm [resolvable:$true] %s18
      %s20 = sshll.u32 [#allocation2], 4
      %s21 = int_to_ptr.vmem [resolvable:$true] %s20
      %23 = dma.hbm_to_vmem [thread:$0]  %s19, 128, %s21, [#allocation3]
    $region5: #{tpu_custom_call.1} parent=1 // pred_fallthru
      _
    // Predicated region
    $region6: #{tpu_custom_call.1} parent=1 // pred_check
      _
    $region7: #{tpu_custom_call.1} parent=1 // pred_check_branch
      %25 = sbr.rel (0) target = $region9
    $region8: #{tpu_custom_call.1} parent=1 // pred_region
      %27 = vsyncadd [#allocation6], 0
      %s28 = sshll.u32 %s1, 4
      %s29 = int_to_ptr.hbm [resolvable:$true] %s28
      %s30 = sshll.u32 [#allocation5], 4
      %s31 = int_to_ptr.vmem [resolvable:$true] %s30
      %36 = dma.hbm_to_vmem [thread:$0]  %s29, 256, %s31, [#allocation6], 64, 64, 4
    $region9: #{tpu_custom_call.1} parent=1 // pred_fallthru
      _
    // Predicated region
    $region10: #{tpu_custom_call.1} parent=1 // pred_check
      _
    $region11: #{tpu_custom_call.1} parent=1 // pred_check_branch
      %38 = sbr.rel (0) target = $region13
    $region12: #{tpu_custom_call.1} parent=1 // pred_region
      _
    $region13: #{tpu_custom_call.1} parent=1 // pred_fallthru
      _
    // Predicated region
    $region14: #{tpu_custom_call.1} parent=1 // pred_check
      _
    $region15: #{tpu_custom_call.1} parent=1 // pred_check_branch
      %40 = sbr.rel (0) target = $region17
    $region16: #{tpu_custom_call.1} parent=1 // pred_region
      _
    $region17: #{tpu_custom_call.1} parent=1 // pred_fallthru
      _
    // Predicated region
    $region18: #{tpu_custom_call.1} parent=1 // pred_check
      _
    $region19: #{tpu_custom_call.1} parent=1 // pred_check_branch
      %42 = sbr.rel (0) target = $region21
    $region20: #{tpu_custom_call.1} parent=1 // pred_region
      _
    $region21: #{tpu_custom_call.1} parent=1 // pred_fallthru
      _
    // Predicated region
    $region22: #{tpu_custom_call.1} parent=1 // pred_check
      _
    $region23: #{tpu_custom_call.1} parent=1 // pred_check_branch
      %44 = sbr.rel (0) target = $region25
    $region24: #{tpu_custom_call.1} parent=1 // pred_region
      %46 = dma.done [#allocation3], 128
    $region25: #{tpu_custom_call.1} parent=1 // pred_fallthru
      _
    // Predicated region
    $region26: #{tpu_custom_call.1} parent=1 // pred_check
      _
    $region27: #{tpu_custom_call.1} parent=1 // pred_check_branch
      %48 = sbr.rel (0) target = $region29
    $region28: #{tpu_custom_call.1} parent=1 // pred_region
      %50 = dma.done [#allocation6], 256
    $region29: #{tpu_custom_call.1} parent=1 // pred_fallthru
      _
    %v52 = vld [vmem:[#allocation2] sm:$0xff]
    %v53 = vpack.c.bf16 %v52, %v52
    %v54 = vld [vmem:[#allocation5] sm:$0xf]
    %v55 = vld [vmem:[#allocation5 + $0x4] sm:$0xf]
    %v56 = vld [vmem:[#allocation5 + $0x8] sm:$0xf]
    %v57 = vld [vmem:[#allocation5 + $0xc] sm:$0xf]
    %v58 = vld [vmem:[%s4] sm:$0x1]
    %v60 = vperm.slane %v58, 0
    %v66 = vunpack.c.l.b16 %v54
    %v67 = vunpack.c.l.b16 %v55
    %v68 = vunpack.c.l.b16 %v56
    %v69 = vunpack.c.l.b16 %v57
    %v70 = vpack.c.b16 %v67, %v66
    %v71 = vpack.c.b16 %v69, %v68
    %vm74 = vcmask 261120
    %v76 = vsel %vm74, %v53, 0
    %78 = vmatpush.bf16.msra.mxu0 0
    %79 = vmatpush.bf16.msra.mxu0 0
    %80 = vmatpush.bf16.msra.mxu0 0
    %81 = vmatpush.bf16.msra.mxu0 0
    %82 = vmatpush.bf16.msra.mxu0 0
    %83 = vmatpush.bf16.msra.mxu0 0
    %84 = vmatpush.bf16.msra.mxu0 %v71
    %85 = vmatpush.bf16.msra.mxu0 %v70
    %86 = vmatmul.bf16.gmra.mxu0 %v76
    %v87 = vpop.f32.mrf.mxu0
    %v88 = vadd.f32 %v60, %v87
    %v89 = vpop.f32.mrf.mxu0
    %90 = vdwg.mxu0
    %v91 = vmax.f32 %v88, 0.0
    %v92 = vpack.c.bf16 %v91, %v91
    %v93 = vld [vmem:[%s2] sm:$0xf]
    %v94 = vld [vmem:[%s2 + $0x4] sm:$0xf]
    %v95 = vld [vmem:[%s2 + $0x8] sm:$0xf]
    %v96 = vld [vmem:[%s2 + $0xc] sm:$0xf]
    %v97 = vld [vmem:[%s2 + $0x10] sm:$0xf]
    %v98 = vld [vmem:[%s2 + $0x14] sm:$0xf]
    %v99 = vld [vmem:[%s2 + $0x18] sm:$0xf]
    %v100 = vld [vmem:[%s2 + $0x1c] sm:$0xf]
    %v101 = vld [vmem:[%s2 + $0x20] sm:$0xf]
    %v102 = vld [vmem:[%s2 + $0x24] sm:$0xf]
    %v103 = vld [vmem:[%s2 + $0x28] sm:$0xf]
    %v104 = vld [vmem:[%s2 + $0x2c] sm:$0xf]
    %v105 = vld [vmem:[%s2 + $0x30] sm:$0xf]
    %v106 = vld [vmem:[%s2 + $0x34] sm:$0xf]
    %v107 = vld [vmem:[%s2 + $0x38] sm:$0xf]
    %v108 = vld [vmem:[%s2 + $0x3c] sm:$0xf]
    %v109 = vld [vmem:[%s4 + $0x1] sm:$0x1]
    %v111 = vperm.slane %v109, 0
    %v129 = vunpack.c.l.b16 %v93
    %v130 = vunpack.c.l.b16 %v94
    %v131 = vunpack.c.l.b16 %v95
    %v132 = vunpack.c.l.b16 %v96
    %v133 = vunpack.c.l.b16 %v97
    %v134 = vunpack.c.l.b16 %v98
    %v135 = vunpack.c.l.b16 %v99
    %v136 = vunpack.c.l.b16 %v100
    %v137 = vunpack.c.l.b16 %v101
    %v138 = vunpack.c.l.b16 %v102
    %v139 = vunpack.c.l.b16 %v103
    %v140 = vunpack.c.l.b16 %v104
    %v141 = vunpack.c.l.b16 %v105
    %v142 = vunpack.c.l.b16 %v106
    %v143 = vunpack.c.l.b16 %v107
    %v144 = vunpack.c.l.b16 %v108
    %v145 = vpack.c.b16 %v130, %v129
    %v146 = vpack.c.b16 %v132, %v131
    %v147 = vpack.c.b16 %v134, %v133
    %v148 = vpack.c.b16 %v136, %v135
    %v149 = vpack.c.b16 %v138, %v137
    %v150 = vpack.c.b16 %v140, %v139
    %v151 = vpack.c.b16 %v142, %v141
    %v152 = vpack.c.b16 %v144, %v143
    %161 = vmatpush.bf16.msra.mxu0 %v152
    %162 = vmatpush.bf16.msra.mxu0 %v151
    %163 = vmatpush.bf16.msra.mxu0 %v150
    %164 = vmatpush.bf16.msra.mxu0 %v149
    %165 = vmatpush.bf16.msra.mxu0 %v148
    %166 = vmatpush.bf16.msra.mxu0 %v147
    %167 = vmatpush.bf16.msra.mxu0 %v146
    %168 = vmatpush.bf16.msra.mxu0 %v145
    %169 = vmatmul.bf16.gmra.mxu0 %v92
    %v170 = vpop.f32.mrf.mxu0
    %v171 = vadd.f32 %v111, %v170
    %v172 = vpop.f32.mrf.mxu0
    %173 = vdwg.mxu0
    %v174 = vmax.f32 %v171, 0.0
    %v175 = vpack.c.bf16 %v174, %v174
    %v176 = vld [vmem:[%s3] sm:$0xf]
    %v177 = vld [vmem:[%s3 + $0x4] sm:$0xf]
    %v178 = vld [vmem:[%s3 + $0x8] sm:$0xf]
    %v179 = vld [vmem:[%s3 + $0xc] sm:$0xf]
    %v180 = vld [vmem:[%s3 + $0x10] sm:$0xf]
    %v181 = vld [vmem:[%s3 + $0x14] sm:$0xf]
    %v182 = vld [vmem:[%s3 + $0x18] sm:$0xf]
    %v183 = vld [vmem:[%s3 + $0x1c] sm:$0xf]
    %v184 = vld [vmem:[%s3 + $0x20] sm:$0xf]
    %v185 = vld [vmem:[%s3 + $0x24] sm:$0xf]
    %v186 = vld [vmem:[%s3 + $0x28] sm:$0xf]
    %v187 = vld [vmem:[%s3 + $0x2c] sm:$0xf]
    %v188 = vld [vmem:[%s3 + $0x30] sm:$0xf]
    %v189 = vld [vmem:[%s3 + $0x34] sm:$0xf]
    %v190 = vld [vmem:[%s3 + $0x38] sm:$0xf]
    %v191 = vld [vmem:[%s3 + $0x3c] sm:$0xf]
    %v192 = vld [vmem:[%s4 + $0x2] sm:$0x1]
    %v194 = vperm.slane %v192, 0
    %v212 = vunpack.c.l.b16 %v176
    %v213 = vunpack.c.l.b16 %v177
    %v214 = vunpack.c.l.b16 %v178
    %v215 = vunpack.c.l.b16 %v179
    %v216 = vunpack.c.l.b16 %v180
    %v217 = vunpack.c.l.b16 %v181
    %v218 = vunpack.c.l.b16 %v182
    %v219 = vunpack.c.l.b16 %v183
    %v220 = vunpack.c.l.b16 %v184
    %v221 = vunpack.c.l.b16 %v185
    %v222 = vunpack.c.l.b16 %v186
    %v223 = vunpack.c.l.b16 %v187
    %v224 = vunpack.c.l.b16 %v188
    %v225 = vunpack.c.l.b16 %v189
    %v226 = vunpack.c.l.b16 %v190
    %v227 = vunpack.c.l.b16 %v191
    %v228 = vpack.c.b16 %v213, %v212
    %v229 = vpack.c.b16 %v215, %v214
    %v230 = vpack.c.b16 %v217, %v216
    %v231 = vpack.c.b16 %v219, %v218
    %v232 = vpack.c.b16 %v221, %v220
    %v233 = vpack.c.b16 %v223, %v222
    %v234 = vpack.c.b16 %v225, %v224
    %v235 = vpack.c.b16 %v227, %v226
    %244 = vmatpush.bf16.msra.mxu0 %v235
    %245 = vmatpush.bf16.msra.mxu0 %v234
    %246 = vmatpush.bf16.msra.mxu0 %v233
    %247 = vmatpush.bf16.msra.mxu0 %v232
    %248 = vmatpush.bf16.msra.mxu0 %v231
    %249 = vmatpush.bf16.msra.mxu0 %v230
    %250 = vmatpush.bf16.msra.mxu0 %v229
    %251 = vmatpush.bf16.msra.mxu0 %v228
    %252 = vmatmul.bf16.gmra.mxu0 %v175
    %v253 = vpop.f32.mrf.mxu0
    %v254 = vadd.f32 %v194, %v253
    %v255 = vpop.f32.mrf.mxu0
    %256 = vdwg.mxu0
    %vm257 = vcmask 64512
    %258 = vst.msk [vmem:[#allocation7] sm:$0xff] %vm257, %v254
    // Predicated region
    $region30: #{tpu_custom_call.1} parent=1 // pred_check
      _
    $region31: #{tpu_custom_call.1} parent=1 // pred_check_branch
      %260 = sbr.rel (0) target = $region33
    $region32: #{tpu_custom_call.1} parent=1 // pred_region
      %262 = vsyncadd [#allocation4], 0
      %s264 = sshll.u32 [#allocation7], 4
      %s265 = int_to_ptr.vmem [resolvable:$true] %s264
      %s266 = sshll.u32 %s5, 4
      %s267 = int_to_ptr.hbm [resolvable:$true] %s266
      %269 = dma.vmem_to_hbm [thread:$0]  %s265, 128, %s267, [#allocation4]
    $region33: #{tpu_custom_call.1} parent=1 // pred_fallthru
      _
    // Predicated region
    $region34: #{tpu_custom_call.1} parent=1 // pred_check
      _
    $region35: #{tpu_custom_call.1} parent=1 // pred_check_branch
      %271 = sbr.rel (0) target = $region37
    $region36: #{tpu_custom_call.1} parent=1 // pred_region
      %273 = dma.done [#allocation4], 128
    $region37: #{tpu_custom_call.1} parent=1 // pred_fallthru
      _
    %274 = vsyncpa [#allocation3], 1
    %275 = vsyncpa [#allocation6], 1
    %276 = vsyncpa [#allocation4], 1

</llo_original>
